<compile_context>
chip_gen: v7x
topology: tpu7x:2x2x1
jax: 0.10.0
libtpu: 0.0.40
codegen_flags: <defaults>
</compile_context>

<pallas_src>
import jax
import jax.numpy as jnp
from jax.experimental import pallas as pl
from jax.experimental.pallas import tpu as pltpu

K8 = 8                      # decoder contraction width (latent lanes fed to MXU)
FP = 128                    # packed lane width: both decoder heads in one block
DEFAULT_BATCH_TILE = 1024   # rows per grid step (v7x-friendly; 2048-4096 ok on v6e/v5e)


# ---------------------------------------------------------------------------
# Pallas kernel: encoder + sigmoid + both decoder heads for one batch tile.
# ---------------------------------------------------------------------------
def janus_kernel(state_ref, action_ref, we_ref, be_ref, wd_ref, wa_ref, bd_ref,
                 out_ref):
    # ---- encoder: (TB, in) @ (in, 128) + bias -------------------------------
    z = jnp.dot(state_ref[...], we_ref[...],
                preferred_element_type=jnp.float32) + be_ref[...]

    # ---- sigmoid via a single EUP transcendental ----------------------------
    # sigmoid(z) = 0.5 * (1 + tanh(z / 2)); within 1e-3 tolerance of the
    # exact exp/reciprocal form.
    latent = 0.5 * (jnp.tanh(0.5 * z) + 1.0)

    # ---- fused decoders (both heads packed into 128 lanes) ------------------
    # wd rows [hidden, K8) are zero, so latent padding lanes (value 0.5)
    # contribute nothing; wd cols [0,out) = decoderState, [out,2*out) =
    # decoderNextState's latent part.
    latent_k = latent[:, :K8]                                     # (TB, 8)
    dec = jnp.dot(latent_k, wd_ref[...], preferred_element_type=jnp.float32)

    # Action contribution (decoderNextState head only): lane-broadcast
    # multiply-adds on the VPU; wa cols [0,out) are zero.
    act = action_ref[...]                                         # (TB, A)
    wa = wa_ref[...]                                              # (A, 128)
    act_contrib = act[:, 0:1] * wa[0:1, :]
    for a in range(1, act.shape[1]):                              # A == 1 default
        act_contrib = act_contrib + act[:, a:a + 1] * wa[a:a + 1, :]

    out_ref[...] = dec + act_contrib + bd_ref[...]


# ---------------------------------------------------------------------------
# Wrapper factory: packs / pads weights ONCE, returns the per-call forward.
# ---------------------------------------------------------------------------
def make_janus_forward(params, input_neurons=4, hidden_neurons=3,
                       output_neurons=4, action_dim=1,
                       batch_tile=DEFAULT_BATCH_TILE):
    assert 1 <= hidden_neurons <= K8
    assert 2 * output_neurons <= FP
    assert input_neurons >= 1 and action_dim >= 1
    assert batch_tile % 8 == 0

    f32 = jnp.float32
    we, be = params["encoder"]                # we: (in, hid)     be: (hid,)
    wds, bds = params["decoderState"]         # wds: (hid, out)   bds: (out,)
    wdn, bdn = params["decoderNextState"]     # wdn: (hid+a, out) bdn: (out,)

    # encoder weight/bias -> (in, 128) / (1, 128); lanes >= hidden are zero.
    we_p = jnp.zeros((input_neurons, FP), f32).at[:, :hidden_neurons].set(
        we.astype(f32))
    be_p = jnp.zeros((1, FP), f32).at[0, :hidden_neurons].set(be.astype(f32))

    # packed decoder weight (8, 128): both heads side by side in 2*out lanes.
    wd_p = jnp.zeros((K8, FP), f32)
    wd_p = wd_p.at[:hidden_neurons, :output_neurons].set(wds.astype(f32))
    wd_p = wd_p.at[:hidden_neurons,
                   output_neurons:2 * output_neurons].set(
        wdn[:hidden_neurons, :].astype(f32))

    # action rows of decoderNextState -> (action_dim, 128), lanes [out, 2*out).
    wa_p = jnp.zeros((action_dim, FP), f32).at[
        :, output_neurons:2 * output_neurons].set(
        wdn[hidden_neurons:, :].astype(f32))

    # packed decoder bias (1, 128).
    bd_p = jnp.zeros((1, FP), f32)
    bd_p = bd_p.at[0, :output_neurons].set(bds.astype(f32))
    bd_p = bd_p.at[0, output_neurons:2 * output_neurons].set(bdn.astype(f32))

    def forward(state, action):
        if state.ndim <= 1 or action.ndim <= 1:
            raise ValueError(
                "Networks expect any input to be given as a batch. "
                "For single input, provide a batch of size 1.")

        B = state.shape[0]
        tb = B if B <= batch_tile else batch_tile
        steps = pl.cdiv(B, tb)

        out = pl.pallas_call(
            janus_kernel,
            out_shape=jax.ShapeDtypeStruct((B, FP), f32),
            grid=(steps,),
            in_specs=[
                # batch-tiled activations
                pl.BlockSpec((tb, input_neurons), lambda i: (i, 0)),
                pl.BlockSpec((tb, action_dim), lambda i: (i, 0)),
                # weights/biases: constant index maps -> VMEM-resident
                pl.BlockSpec((input_neurons, FP), lambda i: (0, 0)),
                pl.BlockSpec((1, FP), lambda i: (0, 0)),
                pl.BlockSpec((K8, FP), lambda i: (0, 0)),
                pl.BlockSpec((action_dim, FP), lambda i: (0, 0)),
                pl.BlockSpec((1, FP), lambda i: (0, 0)),
            ],
            out_specs=pl.BlockSpec((tb, FP), lambda i: (i, 0)),
            compiler_params=pltpu.CompilerParams(
                dimension_semantics=("parallel",)),
        )(state.astype(f32), action.astype(f32),
          we_p, be_p, wd_p, wa_p, bd_p)

        out_state = out[:, :output_neurons]
        out_next = out[:, output_neurons:2 * output_neurons]
        # torch.cat((outState, outNextState), 0)
        return jnp.concatenate([out_state, out_next], axis=0)

    return forward


# ---------------------------------------------------------------------------
# Deterministic parameter init (mimics nn.Linear uniform(-1/sqrt(fan_in), ...))
# ---------------------------------------------------------------------------
def init_params(key, input_neurons=4, hidden_neurons=3, output_neurons=4,
                action_dim=1):
    def linear(k, fan_in, fan_out):
        kw, kb = jax.random.split(k)
        bound = 1.0 / jnp.sqrt(fan_in)
        w = jax.random.uniform(kw, (fan_in, fan_out), jnp.float32, -bound, bound)
        b = jax.random.uniform(kb, (fan_out,), jnp.float32, -bound, bound)
        return w, b

    k1, k2, k3 = jax.random.split(key, 3)
    return {
        "encoder": linear(k1, input_neurons, hidden_neurons),
        "decoderState": linear(k2, hidden_neurons, output_neurons),
        "decoderNextState": linear(k3, hidden_neurons + action_dim, output_neurons),
    }


def janus_reference(state, action, params):
    we, be = params["encoder"]
    wds, bds = params["decoderState"]
    wdn, bdn = params["decoderNextState"]
    latent = jax.nn.sigmoid(state @ we + be)
    out_state = latent @ wds + bds
    latent_action = jnp.concatenate([latent, action], axis=1)
    out_next = latent_action @ wdn + bdn
    return jnp.concatenate([out_state, out_next], axis=0)


if __name__ == "__main__":
    key = jax.random.PRNGKey(0)
    k_params, k_state, k_action = jax.random.split(key, 3)

    INPUT, HIDDEN, OUTPUT, ACTION = 4, 3, 4, 1
    B = 2

    params = init_params(k_params, INPUT, HIDDEN, OUTPUT, ACTION)
    state = jax.random.normal(k_state, (B, INPUT), jnp.float32)
    action = jax.random.normal(k_action, (B, ACTION), jnp.float32)

    forward = jax.jit(make_janus_forward(params, INPUT, HIDDEN, OUTPUT, ACTION))

    # Small-batch check (module defaults, batch of 2).
    out = jax.block_until_ready(forward(state, action))
    ref = janus_reference(state, action, params)
    assert out.shape == (2 * B, OUTPUT), out.shape
    assert jnp.allclose(out, ref, atol=1e-3, rtol=1e-3)

    # Large-batch check: exercises the multi-step batch grid with
    # VMEM-resident weights (2048 rows -> 2 grid steps of 1024).
    B2 = 2048
    state2 = jax.random.normal(jax.random.PRNGKey(1), (B2, INPUT), jnp.float32)
    action2 = jax.random.normal(jax.random.PRNGKey(2), (B2, ACTION), jnp.float32)
    out2 = jax.block_until_ready(forward(state2, action2))
    ref2 = janus_reference(state2, action2, params)
    assert out2.shape == (2 * B2, OUTPUT), out2.shape
    assert jnp.allclose(out2, ref2, atol=1e-3, rtol=1e-3)

    print("KERNEL_OK")
</pallas_src>

<mosaic_0001>
module attributes {stable_mosaic.version = 11 : i64} {
  func.func @janus_kernel(%arg0: i32, %arg1: memref<2x4xf32, #tpu.memory_space<vmem>>, %arg2: memref<2x1xf32, #tpu.memory_space<vmem>>, %arg3: memref<4x128xf32, #tpu.memory_space<vmem>>, %arg4: memref<1x128xf32, #tpu.memory_space<vmem>>, %arg5: memref<8x128xf32, #tpu.memory_space<vmem>>, %arg6: memref<1x128xf32, #tpu.memory_space<vmem>>, %arg7: memref<1x128xf32, #tpu.memory_space<vmem>>, %arg8: memref<2x128xf32, #tpu.memory_space<vmem>>) attributes {dimension_semantics = [#tpu.dimension_semantics<parallel>], iteration_bounds = array<i64: 1>, scalar_prefetch = 0 : i64, scratch_operands = 0 : i64, tpu.core_type = #tpu.core_type<tc>, window_params = [{transform_indices = @transform_0, window_bounds = array<i64: 2, 4>}, {transform_indices = @transform_1, window_bounds = array<i64: 2, 1>}, {pipeline_mode = #tpu.pipeline_mode<synchronous>, transform_indices = @transform_2, window_bounds = array<i64: 4, 128>}, {pipeline_mode = #tpu.pipeline_mode<synchronous>, transform_indices = @transform_3, window_bounds = array<i64: 1, 128>}, {pipeline_mode = #tpu.pipeline_mode<synchronous>, transform_indices = @transform_4, window_bounds = array<i64: 8, 128>}, {pipeline_mode = #tpu.pipeline_mode<synchronous>, transform_indices = @transform_5, window_bounds = array<i64: 1, 128>}, {pipeline_mode = #tpu.pipeline_mode<synchronous>, transform_indices = @transform_6, window_bounds = array<i64: 1, 128>}, {transform_indices = @transform_7, window_bounds = array<i64: 2, 128>}]} {
    %c0 = arith.constant 0 : index
    %c0_0 = arith.constant 0 : index
    %0 = vector.load %arg1[%c0, %c0_0] : memref<2x4xf32, #tpu.memory_space<vmem>>, vector<2x4xf32>
    %c0_1 = arith.constant 0 : index
    %c0_2 = arith.constant 0 : index
    %1 = vector.load %arg3[%c0_1, %c0_2] : memref<4x128xf32, #tpu.memory_space<vmem>>, vector<4x128xf32>
    %cst = arith.constant dense<0.000000e+00> : vector<2x128xf32>
    %2 = tpu.matmul %0, %1, %cst {dimension_numbers = #tpu.dot_dimension_numbers<[1], [0], [0], [1], [0, 0, 1, 1], [], []>} : vector<2x4xf32>, vector<4x128xf32>, vector<2x128xf32> -> vector<2x128xf32>
    %c0_3 = arith.constant 0 : index
    %c0_4 = arith.constant 0 : index
    %3 = vector.load %arg4[%c0_3, %c0_4] : memref<1x128xf32, #tpu.memory_space<vmem>>, vector<1x128xf32>
    %4 = vector.broadcast %3 : vector<1x128xf32> to vector<2x128xf32>
    %5 = arith.addf %2, %4 : vector<2x128xf32>
    %cst_5 = arith.constant 5.000000e-01 : f32
    %6 = vector.broadcast %cst_5 : f32 to vector<2x128xf32>
    %7 = arith.mulf %6, %5 : vector<2x128xf32>
    %8 = math.tanh %7 : vector<2x128xf32>
    %cst_6 = arith.constant 1.000000e+00 : f32
    %9 = vector.broadcast %cst_6 : f32 to vector<2x128xf32>
    %10 = arith.addf %8, %9 : vector<2x128xf32>
    %cst_7 = arith.constant 5.000000e-01 : f32
    %11 = vector.broadcast %cst_7 : f32 to vector<2x128xf32>
    %12 = arith.mulf %11, %10 : vector<2x128xf32>
    %13 = vector.extract_strided_slice %12 {offsets = [0, 0], sizes = [2, 8], strides = [1, 1]} : vector<2x128xf32> to vector<2x8xf32>
    %c0_8 = arith.constant 0 : index
    %c0_9 = arith.constant 0 : index
    %14 = vector.load %arg5[%c0_8, %c0_9] : memref<8x128xf32, #tpu.memory_space<vmem>>, vector<8x128xf32>
    %cst_10 = arith.constant dense<0.000000e+00> : vector<2x128xf32>
    %15 = tpu.matmul %13, %14, %cst_10 {dimension_numbers = #tpu.dot_dimension_numbers<[1], [0], [0], [1], [0, 0, 1, 1], [], []>} : vector<2x8xf32>, vector<8x128xf32>, vector<2x128xf32> -> vector<2x128xf32>
    %c0_11 = arith.constant 0 : index
    %c0_12 = arith.constant 0 : index
    %16 = vector.load %arg2[%c0_11, %c0_12] : memref<2x1xf32, #tpu.memory_space<vmem>>, vector<2x1xf32>
    %c0_13 = arith.constant 0 : index
    %c0_14 = arith.constant 0 : index
    %17 = vector.load %arg6[%c0_13, %c0_14] : memref<1x128xf32, #tpu.memory_space<vmem>>, vector<1x128xf32>
    %18 = vector.broadcast %16 : vector<2x1xf32> to vector<2x128xf32>
    %19 = vector.broadcast %17 : vector<1x128xf32> to vector<2x128xf32>
    %20 = arith.mulf %18, %19 : vector<2x128xf32>
    %21 = arith.addf %15, %20 : vector<2x128xf32>
    %c0_15 = arith.constant 0 : index
    %c0_16 = arith.constant 0 : index
    %22 = vector.load %arg7[%c0_15, %c0_16] : memref<1x128xf32, #tpu.memory_space<vmem>>, vector<1x128xf32>
    %23 = vector.broadcast %22 : vector<1x128xf32> to vector<2x128xf32>
    %24 = arith.addf %21, %23 : vector<2x128xf32>
    %c0_17 = arith.constant 0 : index
    %c0_18 = arith.constant 0 : index
    %25 = vector.load %arg8[%c0_17, %c0_18] : memref<2x128xf32, #tpu.memory_space<vmem>>, vector<2x128xf32>
    tpu.vector_store %arg8[%c0_17, %c0_18], %24 {strides = array<i32>} : memref<2x128xf32, #tpu.memory_space<vmem>>, vector<2x128xf32>,
    return
  }
  func.func @transform_0(%arg0: i32) -> (i32, i32) {
    %c0_i32 = arith.constant 0 : i32
    %c0_i32_0 = arith.constant 0 : i32
    return %arg0, %c0_i32 : i32, i32
  }
  func.func @transform_1(%arg0: i32) -> (i32, i32) {
    %c0_i32 = arith.constant 0 : i32
    %c0_i32_0 = arith.constant 0 : i32
    return %arg0, %c0_i32 : i32, i32
  }
  func.func @transform_2(%arg0: i32) -> (i32, i32) {
    %c0_i32 = arith.constant 0 : i32
    %c0_i32_0 = arith.constant 0 : i32
    %c0_i32_1 = arith.constant 0 : i32
    return %c0_i32, %c0_i32_0 : i32, i32
  }
  func.func @transform_3(%arg0: i32) -> (i32, i32) {
    %c0_i32 = arith.constant 0 : i32
    %c0_i32_0 = arith.constant 0 : i32
    %c0_i32_1 = arith.constant 0 : i32
    return %c0_i32, %c0_i32_0 : i32, i32
  }
  func.func @transform_4(%arg0: i32) -> (i32, i32) {
    %c0_i32 = arith.constant 0 : i32
    %c0_i32_0 = arith.constant 0 : i32
    %c0_i32_1 = arith.constant 0 : i32
    return %c0_i32, %c0_i32_0 : i32, i32
  }
  func.func @transform_5(%arg0: i32) -> (i32, i32) {
    %c0_i32 = arith.constant 0 : i32
    %c0_i32_0 = arith.constant 0 : i32
    %c0_i32_1 = arith.constant 0 : i32
    return %c0_i32, %c0_i32_0 : i32, i32
  }
  func.func @transform_6(%arg0: i32) -> (i32, i32) {
    %c0_i32 = arith.constant 0 : i32
    %c0_i32_0 = arith.constant 0 : i32
    %c0_i32_1 = arith.constant 0 : i32
    return %c0_i32, %c0_i32_0 : i32, i32
  }
  func.func @transform_7(%arg0: i32) -> (i32, i32) {
    %c0_i32 = arith.constant 0 : i32
    %c0_i32_0 = arith.constant 0 : i32
    return %arg0, %c0_i32 : i32, i32
  }
}

</mosaic_0001>

<llo_original>
// kernel: forward.1
$region0: #{forward.1}
  #allocation0 [shape = 'u32[]', space=smem, size = 0x4, offset = 0x4, fixed_abs, tag = 'smem constant byte address 0x4 - core index']
  #allocation1 [shape = 'u32[144,128]{1,0:T(1,128)}', space=vmem, size = 0x12000, scoped, tag = 'internal scratch']
  %s0 = inlined_call_operand.vmem [shape: f32[2,4], index: 0, kind: input, shape index: {}]
  %s1 = inlined_call_operand.vmem [shape: f32[2,1], index: 1, kind: input, shape index: {}]
  %s2 = inlined_call_operand.vmem [shape: f32[4,128], index: 2, kind: input, shape index: {}]
  %s3 = inlined_call_operand.hbm [shape: f32[1,128], index: 3, kind: input, shape index: {}]
  %s4 = inlined_call_operand.vmem [shape: f32[8,128], index: 4, kind: input, shape index: {}]
  %s5 = inlined_call_operand.vmem [shape: f32[1,128], index: 5, kind: input, shape index: {}]
  %s6 = inlined_call_operand.vmem [shape: f32[1,128], index: 6, kind: input, shape index: {}]
  %s7 = inlined_call_operand.vmem [shape: f32[2,128], index: 7, kind: output, shape index: {}]
  %s8 = sld [smem:[#allocation0]]
  $region42: #{forward.1} parent=0
    _
  %s10 = ssub.s32 1, %s8
  %s11 = scalar_select 0, %s10, %s8
  $region1: #{forward.1} parent=0
    #allocation2 [shape = 'u8[512]{0}', space=vmem, size = 0x400, scoped, tag = 'input window, operand 3, single buffered']
    #allocation3 [shape = 's32[1]{0}', space=sflag, size = 0x4, scoped, tag = 'scoped memory for forward.1']
    %12 = vsyncpa [#allocation3], 0
    // Predicated region
    $region2: #{forward.1} parent=1 // pred_check
      _
    $region3: #{forward.1} parent=1 // pred_check_branch
      %14 = sbr.rel (0) target = $region5
    $region4: #{forward.1} parent=1 // pred_region
      _
    $region5: #{forward.1} parent=1 // pred_fallthru
      _
    // Predicated region
    $region6: #{forward.1} parent=1 // pred_check
      _
    $region7: #{forward.1} parent=1 // pred_check_branch
      %16 = sbr.rel (0) target = $region9
    $region8: #{forward.1} parent=1 // pred_region
      _
    $region9: #{forward.1} parent=1 // pred_fallthru
      _
    // Predicated region
    $region10: #{forward.1} parent=1 // pred_check
      _
    $region11: #{forward.1} parent=1 // pred_check_branch
      %18 = sbr.rel (0) target = $region13
    $region12: #{forward.1} parent=1 // pred_region
      _
    $region13: #{forward.1} parent=1 // pred_fallthru
      _
    // Predicated region
    $region14: #{forward.1} parent=1 // pred_check
      _
    $region15: #{forward.1} parent=1 // pred_check_branch
      %20 = sbr.rel (0) target = $region17
    $region16: #{forward.1} parent=1 // pred_region
      %s22 = ssub.s32 16, 16
      %23 = vsyncadd [#allocation3], %s22
      %s25 = sshll.u32 [#allocation2], 4
      %s26 = int_to_ptr.vmem [resolvable:$true] %s25
      %28 = dma.hbm_to_vmem [thread:$0]  %s3, 16, %s26, [#allocation3]
    $region17: #{forward.1} parent=1 // pred_fallthru
      _
    // Predicated region
    $region18: #{forward.1} parent=1 // pred_check
      _
    $region19: #{forward.1} parent=1 // pred_check_branch
      %30 = sbr.rel (0) target = $region21
    $region20: #{forward.1} parent=1 // pred_region
      _
    $region21: #{forward.1} parent=1 // pred_fallthru
      _
    // Predicated region
    $region22: #{forward.1} parent=1 // pred_check
      _
    $region23: #{forward.1} parent=1 // pred_check_branch
      %32 = sbr.rel (0) target = $region25
    $region24: #{forward.1} parent=1 // pred_region
      _
    $region25: #{forward.1} parent=1 // pred_fallthru
      _
    // Predicated region
    $region26: #{forward.1} parent=1 // pred_check
      _
    $region27: #{forward.1} parent=1 // pred_check_branch
      %34 = sbr.rel (0) target = $region29
    $region28: #{forward.1} parent=1 // pred_region
      _
    $region29: #{forward.1} parent=1 // pred_fallthru
      _
    // Predicated region
    $region30: #{forward.1} parent=1 // pred_check
      _
    $region31: #{forward.1} parent=1 // pred_check_branch
      %36 = sbr.rel (0) target = $region33
    $region32: #{forward.1} parent=1 // pred_region
      %37 = dma.done [#allocation3], 16
    $region33: #{forward.1} parent=1 // pred_fallthru
      _
    %v38 = vld [vmem:[%s0] sm:$0x3]
    %v39 = vld [vmem:[%s2] sm:$0xf]
    %v40 = vld [vmem:[#allocation2] sm:$0x1]
    %v42 = vlaneseq
    %v43 = vshrl.u32 %v42, 7
    %v44 = vsub.s32 0, %v43
    %v45 = vrot.slane %v40, %v44
    %vm47 = vcmask 31744
    %v49 = vsel %vm47, %v38, 0
    %vm51 = vcmask 1043456
    %v53 = vsel %vm51, %v39, 0
    %55 = vmatprep.subr.mxu0 0.0
    %56 = vmatpush1.msra.mxu0 %v53
    %57 = vmatprep.subr.mxu0 0.0
    %58 = vmatpush1.msra.mxu0 0.0
    %59 = vmatprep.subr.mxu0 0.0
    %60 = vmatpush1.msra.mxu0 0.0
    %61 = vmatprep.subr.mxu0 0.0
    %62 = vmatpush1.msra.mxu0 0.0
    %63 = vmatprep.subr.mxu0 0.0
    %64 = vmatpush1.msra.mxu0 0.0
    %65 = vmatprep.subr.mxu0 0.0
    %66 = vmatpush1.msra.mxu0 0.0
    %67 = vmatprep.subr.mxu0 0.0
    %68 = vmatpush1.msra.mxu0 0.0
    %69 = vmatprep.subr.mxu0 0.0
    %70 = vmatpush1.msra.mxu0 0.0
    %71 = vmatprep.subr.mxu0 0.0
    %72 = vmatpush1.msra.mxu0 0.0
    %73 = vmatprep.subr.mxu0 0.0
    %74 = vmatpush1.msra.mxu0 0.0
    %75 = vmatprep.subr.mxu0 0.0
    %76 = vmatpush1.msra.mxu0 0.0
    %77 = vmatprep.subr.mxu0 0.0
    %78 = vmatpush1.msra.mxu0 0.0
    %79 = vmatprep.subr.mxu0 0.0
    %80 = vmatpush1.msra.mxu0 0.0
    %81 = vmatprep.subr.mxu0 0.0
    %82 = vmatpush1.msra.mxu0 0.0
    %83 = vmatprep.subr.mxu0 0.0
    %84 = vmatpush1.msra.mxu0 0.0
    %85 = vmatprep.subr.mxu0 0.0
    %86 = vmatpush1.msra.mxu0 0.0
    %87 = vmatprep.subr.mxu0 0.0
    %88 = vmatpush1.msra.mxu0 0.0
    %89 = vmatprep.subr.mxu0 0.0
    %90 = vmatpush1.msra.mxu0 0.0
    %91 = vmatprep.subr.mxu0 0.0
    %92 = vmatpush1.msra.mxu0 0.0
    %93 = vmatprep.subr.mxu0 0.0
    %94 = vmatpush1.msra.mxu0 0.0
    %95 = vmatprep.subr.mxu0 0.0
    %96 = vmatpush1.msra.mxu0 0.0
    %97 = vmatprep.subr.mxu0 0.0
    %98 = vmatpush1.msra.mxu0 0.0
    %99 = vmatprep.subr.mxu0 0.0
    %100 = vmatpush1.msra.mxu0 0.0
    %101 = vmatprep.subr.mxu0 0.0
    %102 = vmatpush1.msra.mxu0 0.0
    %103 = vmatprep.subr.mxu0 0.0
    %104 = vmatpush1.msra.mxu0 0.0
    %105 = vmatprep.subr.mxu0 0.0
    %106 = vmatpush1.msra.mxu0 0.0
    %107 = vmatprep.subr.mxu0 0.0
    %108 = vmatpush1.msra.mxu0 0.0
    %109 = vmatprep.subr.mxu0 0.0
    %110 = vmatpush1.msra.mxu0 0.0
    %111 = vmatprep.subr.mxu0 0.0
    %112 = vmatpush1.msra.mxu0 0.0
    %113 = vmatprep.subr.mxu0 0.0
    %114 = vmatpush1.msra.mxu0 0.0
    %115 = vmatprep.subr.mxu0 0.0
    %116 = vmatpush1.msra.mxu0 0.0
    %117 = vmatprep.subr.mxu0 0.0
    %118 = vmatpush1.msra.mxu0 0.0
    %119 = vmatprep.mubr.f32.mxu0 0.0
    %120 = vmatmul.mubr.f32.gmra.mrb[0].mxu0 %v49
    %v121 = vpop.f32.mrb[0].mxu0
    %v122 = vadd.f32 %v45, %v121
    %v123 = vpop.f32.mrb[0].mxu0
    %124 = vdwg.mxu0
    %v125 = vmul.f32 %v122, 0.5
    %v126 = vtanh.pop %v125
    %v127 = vadd.f32 %v126, 1.0
    %v128 = vmul.f32 %v127, 0.5
    %v129 = vld [vmem:[%s4] sm:$0xff]
    %v130 = vld [vmem:[%s1] sm:$0x3]
    %v131 = vld [vmem:[%s5] sm:$0x1]
    %133 = vset.pattern.permute.xlu0 0
    %134 = vperm.xlu0 %133, %v130
    %v135 = vpop.permute.xlu0 %134
    %v138 = vlaneseq
    %v139 = vshrl.u32 %v138, 7
    %v140 = vsub.s32 0, %v139
    %v141 = vrot.slane %v131, %v140
    %v143 = vmul.f32 %v135, %v141
    %vm144 = vcmask 64512
    %v146 = vsel %vm144, %v128, 0
    %148 = vmatprep.subr.mxu0 0.0
    %149 = vmatpush1.msra.mxu0 %v129
    %150 = vmatprep.subr.mxu0 0.0
    %151 = vmatpush1.msra.mxu0 0.0
    %152 = vmatprep.subr.mxu0 0.0
    %153 = vmatpush1.msra.mxu0 0.0
    %154 = vmatprep.subr.mxu0 0.0
    %155 = vmatpush1.msra.mxu0 0.0
    %156 = vmatprep.subr.mxu0 0.0
    %157 = vmatpush1.msra.mxu0 0.0
    %158 = vmatprep.subr.mxu0 0.0
    %159 = vmatpush1.msra.mxu0 0.0
    %160 = vmatprep.subr.mxu0 0.0
    %161 = vmatpush1.msra.mxu0 0.0
    %162 = vmatprep.subr.mxu0 0.0
    %163 = vmatpush1.msra.mxu0 0.0
    %164 = vmatprep.subr.mxu0 0.0
    %165 = vmatpush1.msra.mxu0 0.0
    %166 = vmatprep.subr.mxu0 0.0
    %167 = vmatpush1.msra.mxu0 0.0
    %168 = vmatprep.subr.mxu0 0.0
    %169 = vmatpush1.msra.mxu0 0.0
    %170 = vmatprep.subr.mxu0 0.0
    %171 = vmatpush1.msra.mxu0 0.0
    %172 = vmatprep.subr.mxu0 0.0
    %173 = vmatpush1.msra.mxu0 0.0
    %174 = vmatprep.subr.mxu0 0.0
    %175 = vmatpush1.msra.mxu0 0.0
    %176 = vmatprep.subr.mxu0 0.0
    %177 = vmatpush1.msra.mxu0 0.0
    %178 = vmatprep.subr.mxu0 0.0
    %179 = vmatpush1.msra.mxu0 0.0
    %180 = vmatprep.subr.mxu0 0.0
    %181 = vmatpush1.msra.mxu0 0.0
    %182 = vmatprep.subr.mxu0 0.0
    %183 = vmatpush1.msra.mxu0 0.0
    %184 = vmatprep.subr.mxu0 0.0
    %185 = vmatpush1.msra.mxu0 0.0
    %186 = vmatprep.subr.mxu0 0.0
    %187 = vmatpush1.msra.mxu0 0.0
    %188 = vmatprep.subr.mxu0 0.0
    %189 = vmatpush1.msra.mxu0 0.0
    %190 = vmatprep.subr.mxu0 0.0
    %191 = vmatpush1.msra.mxu0 0.0
    %192 = vmatprep.subr.mxu0 0.0
    %193 = vmatpush1.msra.mxu0 0.0
    %194 = vmatprep.subr.mxu0 0.0
    %195 = vmatpush1.msra.mxu0 0.0
    %196 = vmatprep.subr.mxu0 0.0
    %197 = vmatpush1.msra.mxu0 0.0
    %198 = vmatprep.subr.mxu0 0.0
    %199 = vmatpush1.msra.mxu0 0.0
    %200 = vmatprep.subr.mxu0 0.0
    %201 = vmatpush1.msra.mxu0 0.0
    %202 = vmatprep.subr.mxu0 0.0
    %203 = vmatpush1.msra.mxu0 0.0
    %204 = vmatprep.subr.mxu0 0.0
    %205 = vmatpush1.msra.mxu0 0.0
    %206 = vmatprep.subr.mxu0 0.0
    %207 = vmatpush1.msra.mxu0 0.0
    %208 = vmatprep.subr.mxu0 0.0
    %209 = vmatpush1.msra.mxu0 0.0
    %210 = vmatprep.subr.mxu0 0.0
    %211 = vmatpush1.msra.mxu0 0.0
    %212 = vmatprep.mubr.f32.mxu0 0.0
    %213 = vmatmul.mubr.f32.gmra.mrb[0].mxu0 %v146
    %v214 = vpop.f32.mrb[0].mxu0
    %v215 = vadd.f32 %v143, %v214
    %v216 = vpop.f32.mrb[0].mxu0
    %217 = vdwg.mxu0
    %v218 = vld [vmem:[%s6] sm:$0x1]
    %v220 = vlaneseq
    %v221 = vshrl.u32 %v220, 7
    %v222 = vsub.s32 0, %v221
    %v223 = vrot.slane %v218, %v222
    %v225 = vadd.f32 %v215, %v223
    %226 = vst [vmem:[%s7] sm:$0x3] %v225
    // Predicated region
    $region34: #{forward.1} parent=1 // pred_check
      _
    $region35: #{forward.1} parent=1 // pred_check_branch
      %228 = sbr.rel (0) target = $region37
    $region36: #{forward.1} parent=1 // pred_region
      _
    $region37: #{forward.1} parent=1 // pred_fallthru
      _
    // Predicated region
    $region38: #{forward.1} parent=1 // pred_check
      _
    $region39: #{forward.1} parent=1 // pred_check_branch
      %230 = sbr.rel (0) target = $region41
    $region40: #{forward.1} parent=1 // pred_region
      _
    $region41: #{forward.1} parent=1 // pred_fallthru
      _
    %231 = vsyncpa [#allocation3], 1

</llo_original>
